<compile_context>
chip_gen: v6e
topology: v6e:2x2x1
jax: 0.10.0
libtpu: 0.0.40
codegen_flags: <defaults>
</compile_context>

<pallas_src>
import functools
import math

import jax
import jax.numpy as jnp
from jax.experimental import pallas as pl
from jax.experimental.pallas import tpu as pltpu

LANE = 128
LN2 = math.log(2.0)
TWO_PI = 2.0 * math.pi
SQRT_HALF_LOG2E = math.sqrt(0.5 * math.log2(math.e))
K_SIGMA = 6.0  # Gaussian tail cutoff: exp(-0.5 * 6^2) ~ 1.5e-8


def _largest_divisor_leq(n, cap):
    for d in range(min(n, cap), 0, -1):
        if n % d == 0:
            return d
    return 1


def _chirplet_kernel(p_ref, b_ref, out_ref, *, rows_t, sub, bt, n_samples):
    """One (batch-tile, row-block) output block per grid step.

    p_ref:   SMEM f32[10, B_pad]  folded per-batch constants (see _synth)
    b_ref:   SMEM i32[2,  B_pad]  active output-sample range [lo, hi] (unwrapped)
    out_ref: VMEM f32[bt, rows_t, LANE]  (flat sample index = row*128 + col)
    """
    g = pl.program_id(0)      # batch tile
    rb = pl.program_id(1)     # row block
    n_f = float(n_samples)
    n_sub = rows_t // sub

    row_base = rb * rows_t
    # Batch-invariant post-roll sample index for this row block (hoisted).
    ri = jax.lax.broadcasted_iota(jnp.int32, (rows_t, LANE), 0)
    ci = jax.lax.broadcasted_iota(jnp.int32, (rows_t, LANE), 1)
    i_f = (row_base * LANE + ri * LANE + ci).astype(jnp.float32)

    def body(bi, carry):
        b = g * bt + bi
        am_gate = p_ref[0, b]      # am_hz (AM on iff > 0)
        am_c = p_ref[1, b]         # 2*pi*am/sr
        am_off = p_ref[2, b]       # -2*pi*am*half/sr
        fm_s = p_ref[3, b]         # fm/sr
        fm_off = p_ref[4, b]       # -fm*half/sr
        P = p_ref[5, b]            # 2*pi*f0/(fm*ln2)
        kk = p_ref[6, b]           # fm*sqrt(0.5*log2 e)/(sigma0*bw)
        k_off = p_ref[7, b]        # -kk*center
        log2fm = p_ref[8, b]       # log2(fm)
        delta_f = p_ref[9, b]      # roll shift, normalized to [0, N)
        lo = b_ref[0, b]
        hi = b_ref[1, b]

        for s in range(n_sub):     # static, small (n_sub <= 8)
            r0 = s * sub
            a0 = (row_base + r0) * LANE        # first output sample of chunk
            a1 = a0 + sub * LANE               # one-past-last
            # Does this chunk intersect the (possibly wrapped) active range
            # [lo, hi] mod N?  (lo, hi are unwrapped, lo <= hi < 2N.)
            active = jnp.logical_or(
                jnp.logical_and(a0 <= hi, a1 > lo),
                jnp.logical_and(a0 <= hi - n_samples, a1 > lo - n_samples))

            @pl.when(active)
            def _():
                idx = i_f if sub == rows_t else i_f[r0:r0 + sub]
                # torch.roll: out[i] = chirp[(i - delta) mod N]; delta in [0, N)
                # => i - delta in (-N, N): a single branchless wrap suffices.
                jf = idx - delta_f
                jf = jnp.where(jf < 0.0, jf + n_f, jf)
                e = jnp.exp2(fm_s * jf + fm_off)            # 2^(fm*t)
                carrier = jnp.sin(P * (e - 1.0))            # sin(2*pi*phi)
                q = kk * jf + k_off
                chirp = carrier * jnp.exp2(log2fm - q * q)  # carrier*fm*window

                @pl.when(am_gate > 0.0)
                def _():
                    out_ref[bi, pl.ds(r0, sub), :] = (
                        chirp * jnp.sin(am_c * jf + am_off))

                @pl.when(am_gate <= 0.0)
                def _():
                    out_ref[bi, pl.ds(r0, sub), :] = chirp

            @pl.when(jnp.logical_not(active))
            def _():
                out_ref[bi, pl.ds(r0, sub), :] = jnp.zeros((sub, LANE),
                                                           jnp.float32)

        return carry

    jax.lax.fori_loop(0, bt, body, 0, unroll=min(4, bt))


class ChirpletSynthPallas:
    def __init__(self, sr, n_samples, bw_n_samples, f0_min_hz, f0_max_hz,
                 J_cqt=5, Q=12, hop_len=256,
                 am_hz_min=4.0, am_hz_max=16.0,
                 fm_oct_hz_min=0.5, fm_oct_hz_max=4.0,
                 delta_frac_min=None, delta_frac_max=None, sigma0=0.1,
                 max_batch_tile=None):
        assert bw_n_samples <= n_samples
        assert n_samples % LANE == 0 and (n_samples // LANE) % 8 == 0, \
            "n_samples must tile to (8k, 128) for the TPU layout"
        bw_frac = bw_n_samples / n_samples
        max_delta_frac = (1.0 - bw_frac) / 2.0
        if delta_frac_min is None:
            delta_frac_min = -max_delta_frac
        if delta_frac_max is None:
            delta_frac_max = max_delta_frac
        assert -max_delta_frac <= delta_frac_min <= delta_frac_max <= max_delta_frac
        assert f0_max_hz >= f0_min_hz

        self.sr = float(sr)
        self.n_samples = int(n_samples)
        self.bw_n_samples = int(bw_n_samples)
        self.sigma0 = float(sigma0)
        self.rows = self.n_samples // LANE

        # Row-block split: >=2 blocks when possible so both v7x TensorCores get
        # work even on the B=1 forward() path; on v5e/v6e it's a cheap serial loop.
        self.rows_t = self.rows // 2 if self.rows % 16 == 0 else self.rows
        self.n_rowblocks = self.rows // self.rows_t
        # Sub-chunk size for the Gaussian-tail skip: >=1 vreg (8 rows x 128) of
        # work per chunk, bounded chunk count to limit unrolled code size.
        n_sub = _largest_divisor_leq(self.rows_t // 8, 8)
        self.sub = self.rows_t // n_sub
        self.max_batch_tile = max_batch_tile

        # Generation-aware VMEM sizing (v7x: 64 MiB/TC; v5e/v6e: 128 MiB).
        try:
            phys_vmem = int(pltpu.get_tpu_info().vmem_capacity_bytes)
        except Exception:
            phys_vmem = 64 << 20
        self._vmem_limit_bytes = int(min(phys_vmem // 2, 64 << 20))
        self._block_budget = max(1 << 20, self._vmem_limit_bytes // 4)

        self.f0_min_hz_log2 = math.log2(f0_min_hz)
        self.f0_max_hz_log2 = math.log2(f0_max_hz)
        self.f0_hz = f0_min_hz if f0_min_hz == f0_max_hz else None

        self.am_hz_min_log2 = math.log2(am_hz_min)
        self.am_hz_max_log2 = math.log2(am_hz_max)
        self.fm_oct_hz_min_log2 = math.log2(fm_oct_hz_min)
        self.fm_oct_hz_max_log2 = math.log2(fm_oct_hz_max)

        self.delta_min = int(delta_frac_min * n_samples)
        self.delta_max = int(delta_frac_max * n_samples)

    # ---- batch tiling ----------------------------------------------------
    def _batch_tile(self, B):
        # One fat tile per step when it fits (the grid is a serial loop on
        # v5e/v6e); the row-block grid axis provides the 2-way v7x split.
        bt_cap = max(1, self._block_budget // (2 * self.rows_t * LANE * 4))
        bt = min(B, bt_cap)
        if self.max_batch_tile is not None:
            bt = min(bt, self.max_batch_tile)
        return max(1, bt)

    # ---- Pallas hot path ------------------------------------------------
    def _synth(self, am_hz, fm_oct_hz, f0_hz, delta):
        """Batched chirplet synthesis. All args are 1-D arrays of length B."""
        am = jnp.asarray(am_hz, jnp.float32)
        fm = jnp.asarray(fm_oct_hz, jnp.float32)
        f0 = jnp.asarray(f0_hz, jnp.float32)
        delta_i = jnp.mod(jnp.asarray(delta, jnp.int32), self.n_samples)  # [0,N)
        B = am.shape[0]

        n = self.n_samples
        half = float(n // 2)
        center = (n - 1) / 2.0
        inv_sr = 1.0 / self.sr

        # Fold every per-batch constant into the transcendental arguments.
        am_c = (TWO_PI * inv_sr) * am
        fm_s = inv_sr * fm
        kk = (SQRT_HALF_LOG2E / (self.sigma0 * self.bw_n_samples)) * fm
        params = jnp.stack([
            am,                           # AM gate
            am_c,                         # 2*pi*am/sr
            -half * am_c,                 # modulator phase offset
            fm_s,                         # fm/sr
            -half * fm_s,                 # chirp exponent offset
            (TWO_PI / LN2) * f0 / fm,     # P = 2*pi*f0/(fm*ln2)
            kk,                           # Gaussian arg scale
            -center * kk,                 # Gaussian arg offset
            jnp.log2(fm),                 # folds the *fm amplitude into exp2
            delta_i.astype(jnp.float32),  # roll shift
        ], axis=0)                        # (10, B): long axis last for SMEM

        # Active window range in post-roll sample indices (unwrapped [lo, hi],
        # interpreted mod N in the kernel). Tail beyond 6 sigma is ~1.5e-8.
        kw = (K_SIGMA * self.sigma0 * self.bw_n_samples) / fm
        clo = jnp.clip(jnp.floor(center - kw), 0.0, float(n - 1)).astype(jnp.int32)
        chi = jnp.clip(jnp.ceil(center + kw), 0.0, float(n - 1)).astype(jnp.int32)
        bounds = jnp.stack([clo + delta_i, chi + delta_i], axis=0)  # (2, B) i32

        bt = self._batch_tile(B)
        num_tiles = -(-B // bt)
        b_pad = num_tiles * bt
        if b_pad != B:
            padw = b_pad - B
            params = jnp.pad(params, ((0, 0), (0, padw)), mode="edge")
            pad_bounds = jnp.tile(jnp.array([[2 * n + 1], [-1]], jnp.int32),
                                  (1, padw))                 # never active
            bounds = jnp.concatenate([bounds, pad_bounds], axis=1)

        kernel = functools.partial(_chirplet_kernel, rows_t=self.rows_t,
                                   sub=self.sub, bt=bt, n_samples=n)

        out = pl.pallas_call(
            kernel,
            out_shape=jax.ShapeDtypeStruct((b_pad, self.rows, LANE),
                                           jnp.float32),
            grid=(num_tiles, self.n_rowblocks),
            in_specs=[pl.BlockSpec(memory_space=pltpu.MemorySpace.SMEM),
                      pl.BlockSpec(memory_space=pltpu.MemorySpace.SMEM)],
            out_specs=pl.BlockSpec((bt, self.rows_t, LANE),
                                   lambda g, r: (g, r, 0)),
            compiler_params=pltpu.CompilerParams(
                dimension_semantics=("parallel", "parallel"),
                vmem_limit_bytes=self._vmem_limit_bytes),
        )(params, bounds)
        return out.reshape(b_pad, n)[:B]

    # ---- glue (randomness / parameter mapping) --------------------------
    def _draw_random(self, seed):
        key = jax.random.PRNGKey(seed)
        kd, kf = jax.random.split(key)
        delta = jax.random.randint(kd, (), self.delta_min, self.delta_max + 1)
        if self.f0_hz is not None:
            f0_hz = jnp.float32(self.f0_hz)
        else:
            u = jax.random.uniform(kf, (), dtype=jnp.float32)
            f0_hz = 2.0 ** (u * (self.f0_max_hz_log2 - self.f0_min_hz_log2)
                            + self.f0_min_hz_log2)
        return delta, f0_hz

    def forward(self, theta_am_hz, theta_fm_hz, seed):
        theta_am_hz = jnp.asarray(theta_am_hz, jnp.float32)
        theta_fm_hz = jnp.asarray(theta_fm_hz, jnp.float32)
        assert theta_am_hz.ndim == 0 and theta_fm_hz.ndim == 0
        delta, f0_hz = self._draw_random(seed)
        out = self._synth(theta_am_hz[None], theta_fm_hz[None],
                          f0_hz[None], delta[None])
        return out[0]  # shape (n_samples,)

    def make_x_from_theta(self, theta_am_hz_0to1, theta_fm_hz_0to1, seed):
        theta_am_hz_0to1 = jnp.asarray(theta_am_hz_0to1, jnp.float32)
        theta_fm_hz_0to1 = jnp.asarray(theta_fm_hz_0to1, jnp.float32)
        seed = jnp.asarray(seed, jnp.int32)
        assert theta_am_hz_0to1.ndim == 1 and theta_fm_hz_0to1.ndim == 1

        theta_am_hz = 2.0 ** (theta_am_hz_0to1
                              * (self.am_hz_max_log2 - self.am_hz_min_log2)
                              + self.am_hz_min_log2)
        theta_fm_hz = 2.0 ** (theta_fm_hz_0to1
                              * (self.fm_oct_hz_max_log2 - self.fm_oct_hz_min_log2)
                              + self.fm_oct_hz_min_log2)

        deltas, f0s = jax.vmap(self._draw_random)(seed)
        x = self._synth(theta_am_hz, theta_fm_hz, f0s, deltas)
        return x[:, None, :]  # (B, 1, n_samples) like torch .unsqueeze(1)


# ---- pure-JAX reference (mirrors ChirpletSynth.generate_am_chirp) ----------
def _ref_chirplet(sr, n_samples, bw_n_samples, sigma0, am_hz, fm_oct_hz,
                  f0_hz, delta):
    n = jnp.arange(n_samples, dtype=jnp.float32)
    t = (n - n_samples // 2) / sr
    phi = f0_hz / (fm_oct_hz * LN2) * (2.0 ** (fm_oct_hz * t) - 1.0)
    carrier = jnp.sin(TWO_PI * phi)
    modulator = jnp.sin(TWO_PI * am_hz * t)
    window_std = sigma0 * bw_n_samples / fm_oct_hz
    window = jnp.exp(-0.5 * ((n - (n_samples - 1) / 2.0) / window_std) ** 2)
    chirp = carrier * fm_oct_hz * window
    if am_hz > 0:
        chirp = chirp * modulator
    return jnp.roll(chirp, delta)


if __name__ == "__main__":
    synth = ChirpletSynthPallas(
        sr=16000.0, n_samples=2048, bw_n_samples=1024,
        f0_min_hz=220.0, f0_max_hz=880.0)

    key = jax.random.PRNGKey(0)
    k1, k2 = jax.random.split(key)
    B = 2
    theta_am_0to1 = jax.random.uniform(k1, (B,), dtype=jnp.float32)
    theta_fm_0to1 = jax.random.uniform(k2, (B,), dtype=jnp.float32)
    seeds = jnp.arange(B, dtype=jnp.int32)

    # batched path (make_x_from_theta)
    x = synth.make_x_from_theta(theta_am_0to1, theta_fm_0to1, seeds)
    x = jax.block_until_ready(x)
    assert x.shape == (B, 1, 2048) and x.dtype == jnp.float32

    # single forward path (B=1, exercises the dual row-block split)
    y = synth.forward(jnp.float32(8.0), jnp.float32(2.0), 123)
    y = jax.block_until_ready(y)
    assert y.shape == (2048,) and y.dtype == jnp.float32
    assert bool(jnp.all(jnp.isfinite(x))) and bool(jnp.all(jnp.isfinite(y)))

    # correctness spot-check vs pure-JAX reference: AM on/off, zero and negative
    # roll; run on (a) the default synth (single fat batch tile) and (b) a synth
    # with a tiny batch-tile cap to exercise multi-tile + batch padding.
    ams = [8.0, 0.0, 4.0]
    fms = [2.0, 1.0, 3.0]
    f0s = [220.0, 110.0, 440.0]
    dls = [100, 0, -257]
    refs = [_ref_chirplet(16000.0, 2048, 1024, 0.1, ams[i], fms[i], f0s[i],
                          dls[i]) for i in range(3)]
    synth_small_tile = ChirpletSynthPallas(
        sr=16000.0, n_samples=2048, bw_n_samples=1024,
        f0_min_hz=220.0, f0_max_hz=880.0, max_batch_tile=2)
    for s in (synth, synth_small_tile):
        got = s._synth(jnp.array(ams, jnp.float32), jnp.array(fms, jnp.float32),
                       jnp.array(f0s, jnp.float32), jnp.array(dls, jnp.int32))
        got = jax.block_until_ready(got)
        for i in range(3):
            assert float(jnp.max(jnp.abs(got[i] - refs[i]))) < 2e-2

    print("KERNEL_OK")
</pallas_src>

<mosaic_0001>
module attributes {stable_mosaic.version = 11 : i64} {
  func.func @_chirplet_kernel(%arg0: i32, %arg1: i32, %arg2: memref<10x2xf32, #tpu.memory_space<smem>>, %arg3: memref<2x2xi32, #tpu.memory_space<smem>>, %arg4: memref<2x8x128xf32, #tpu.memory_space<vmem>>) attributes {dimension_semantics = [#tpu.dimension_semantics<parallel>, #tpu.dimension_semantics<parallel>], iteration_bounds = array<i64: 1, 2>, scalar_prefetch = 0 : i64, scratch_operands = 0 : i64, tpu.core_type = #tpu.core_type<tc>, window_params = [{transform_indices = @transform_0, window_bounds = array<i64: 10, 2>}, {transform_indices = @transform_1, window_bounds = array<i64: 2, 2>}, {transform_indices = @transform_2, window_bounds = array<i64: 2, 8, 128>}]} {
    %c8_i32 = arith.constant 8 : i32
    %0 = arith.muli %arg1, %c8_i32 : i32
    %1 = tpu.iota {dimensions = array<i32: 0>} : vector<8x128xi32>
    %2 = tpu.iota {dimensions = array<i32: 1>} : vector<8x128xi32>
    %c128_i32 = arith.constant 128 : i32
    %3 = arith.muli %0, %c128_i32 : i32
    %c128_i32_0 = arith.constant 128 : i32
    %4 = vector.broadcast %c128_i32_0 : i32 to vector<8x128xi32>
    %5 = arith.muli %1, %4 : vector<8x128xi32>
    %6 = vector.broadcast %3 : i32 to vector<8x128xi32>
    %7 = arith.addi %6, %5 : vector<8x128xi32>
    %8 = arith.addi %7, %2 : vector<8x128xi32>
    %9 = arith.sitofp %8 : vector<8x128xi32> to vector<8x128xf32>
    %c0_i32 = arith.constant 0 : i32
    %c2_i32 = arith.constant 2 : i32
    %10 = arith.muli %arg0, %c2_i32 : i32
    %11 = arith.addi %10, %c0_i32 : i32
    %c0 = arith.constant 0 : index
    %12 = arith.index_cast %11 : i32 to index
    %13 = memref.load %arg2[%c0, %12] : memref<10x2xf32, #tpu.memory_space<smem>>
    %c1 = arith.constant 1 : index
    %14 = arith.index_cast %11 : i32 to index
    %15 = memref.load %arg2[%c1, %14] : memref<10x2xf32, #tpu.memory_space<smem>>
    %c2 = arith.constant 2 : index
    %16 = arith.index_cast %11 : i32 to index
    %17 = memref.load %arg2[%c2, %16] : memref<10x2xf32, #tpu.memory_space<smem>>
    %c3 = arith.constant 3 : index
    %18 = arith.index_cast %11 : i32 to index
    %19 = memref.load %arg2[%c3, %18] : memref<10x2xf32, #tpu.memory_space<smem>>
    %c4 = arith.constant 4 : index
    %20 = arith.index_cast %11 : i32 to index
    %21 = memref.load %arg2[%c4, %20] : memref<10x2xf32, #tpu.memory_space<smem>>
    %c5 = arith.constant 5 : index
    %22 = arith.index_cast %11 : i32 to index
    %23 = memref.load %arg2[%c5, %22] : memref<10x2xf32, #tpu.memory_space<smem>>
    %c6 = arith.constant 6 : index
    %24 = arith.index_cast %11 : i32 to index
    %25 = memref.load %arg2[%c6, %24] : memref<10x2xf32, #tpu.memory_space<smem>>
    %c7 = arith.constant 7 : index
    %26 = arith.index_cast %11 : i32 to index
    %27 = memref.load %arg2[%c7, %26] : memref<10x2xf32, #tpu.memory_space<smem>>
    %c8 = arith.constant 8 : index
    %28 = arith.index_cast %11 : i32 to index
    %29 = memref.load %arg2[%c8, %28] : memref<10x2xf32, #tpu.memory_space<smem>>
    %c9 = arith.constant 9 : index
    %30 = arith.index_cast %11 : i32 to index
    %31 = memref.load %arg2[%c9, %30] : memref<10x2xf32, #tpu.memory_space<smem>>
    %c0_1 = arith.constant 0 : index
    %32 = arith.index_cast %11 : i32 to index
    %33 = memref.load %arg3[%c0_1, %32] : memref<2x2xi32, #tpu.memory_space<smem>>
    %c1_2 = arith.constant 1 : index
    %34 = arith.index_cast %11 : i32 to index
    %35 = memref.load %arg3[%c1_2, %34] : memref<2x2xi32, #tpu.memory_space<smem>>
    %c0_i32_3 = arith.constant 0 : i32
    %36 = arith.addi %0, %c0_i32_3 : i32
    %c128_i32_4 = arith.constant 128 : i32
    %37 = arith.muli %36, %c128_i32_4 : i32
    %c1024_i32 = arith.constant 1024 : i32
    %38 = arith.addi %37, %c1024_i32 : i32
    %39 = arith.cmpi sle, %37, %35 : i32
    %40 = arith.cmpi sgt, %38, %33 : i32
    %41 = arith.andi %39, %40 : i1
    %c2048_i32 = arith.constant 2048 : i32
    %42 = arith.subi %35, %c2048_i32 : i32
    %43 = arith.cmpi sle, %37, %42 : i32
    %c2048_i32_5 = arith.constant 2048 : i32
    %44 = arith.subi %33, %c2048_i32_5 : i32
    %45 = arith.cmpi sgt, %38, %44 : i32
    %46 = arith.andi %43, %45 : i1
    %47 = arith.ori %41, %46 : i1
    %48 = arith.extui %47 : i1 to i32
    %c0_i32_6 = arith.constant 0 : i32
    %49 = arith.cmpi ne, %48, %c0_i32_6 : i32
    scf.if %49 {
      %96 = vector.broadcast %31 : f32 to vector<8x128xf32>
      %97 = arith.subf %9, %96 : vector<8x128xf32>
      %cst = arith.constant 0.000000e+00 : f32
      %98 = vector.broadcast %cst : f32 to vector<8x128xf32>
      %99 = arith.cmpf olt, %97, %98 : vector<8x128xf32>
      %cst_30 = arith.constant 2.048000e+03 : f32
      %100 = vector.broadcast %cst_30 : f32 to vector<8x128xf32>
      %101 = arith.addf %97, %100 : vector<8x128xf32>
      %102 = arith.select %99, %101, %97 : vector<8x128xi1>, vector<8x128xf32>
      %103 = vector.broadcast %19 : f32 to vector<8x128xf32>
      %104 = arith.mulf %103, %102 : vector<8x128xf32>
      %105 = vector.broadcast %21 : f32 to vector<8x128xf32>
      %106 = arith.addf %104, %105 : vector<8x128xf32>
      %107 = math.exp2 %106 : vector<8x128xf32>
      %cst_31 = arith.constant 1.000000e+00 : f32
      %108 = vector.broadcast %cst_31 : f32 to vector<8x128xf32>
      %109 = arith.subf %107, %108 : vector<8x128xf32>
      %110 = vector.broadcast %23 : f32 to vector<8x128xf32>
      %111 = arith.mulf %110, %109 : vector<8x128xf32>
      %112 = math.sin %111 : vector<8x128xf32>
      %113 = vector.broadcast %25 : f32 to vector<8x128xf32>
      %114 = arith.mulf %113, %102 : vector<8x128xf32>
      %115 = vector.broadcast %27 : f32 to vector<8x128xf32>
      %116 = arith.addf %114, %115 : vector<8x128xf32>
      %117 = arith.mulf %116, %116 : vector<8x128xf32>
      %118 = vector.broadcast %29 : f32 to vector<8x128xf32>
      %119 = arith.subf %118, %117 : vector<8x128xf32>
      %120 = math.exp2 %119 : vector<8x128xf32>
      %121 = arith.mulf %112, %120 : vector<8x128xf32>
      %cst_32 = arith.constant 0.000000e+00 : f32
      %122 = arith.cmpf ogt, %13, %cst_32 : f32
      %123 = arith.extui %122 : i1 to i32
      %c0_i32_33 = arith.constant 0 : i32
      %124 = arith.cmpi ne, %123, %c0_i32_33 : i32
      scf.if %124 {
        %128 = vector.broadcast %15 : f32 to vector<8x128xf32>
        %129 = arith.mulf %128, %102 : vector<8x128xf32>
        %130 = vector.broadcast %17 : f32 to vector<8x128xf32>
        %131 = arith.addf %129, %130 : vector<8x128xf32>
        %132 = math.sin %131 : vector<8x128xf32>
        %133 = arith.mulf %121, %132 : vector<8x128xf32>
        %134 = arith.index_cast %c0_i32 : i32 to index
        %c0_36 = arith.constant 0 : index
        %c0_37 = arith.constant 0 : index
        %135 = vector.load %arg4[%134, %c0_36, %c0_37] : memref<2x8x128xf32, #tpu.memory_space<vmem>>, vector<1x8x128xf32>
        %136 = vector.shape_cast %135 : vector<1x8x128xf32> to vector<8x128xf32>
        %137 = vector.shape_cast %133 : vector<8x128xf32> to vector<1x8x128xf32>
        tpu.vector_store %arg4[%134, %c0_36, %c0_37], %137 {strides = array<i32>} : memref<2x8x128xf32, #tpu.memory_space<vmem>>, vector<1x8x128xf32>,
      } else {
      }
      %cst_34 = arith.constant 0.000000e+00 : f32
      %125 = arith.cmpf ole, %13, %cst_34 : f32
      %126 = arith.extui %125 : i1 to i32
      %c0_i32_35 = arith.constant 0 : i32
      %127 = arith.cmpi ne, %126, %c0_i32_35 : i32
      scf.if %127 {
        %128 = arith.index_cast %c0_i32 : i32 to index
        %c0_36 = arith.constant 0 : index
        %c0_37 = arith.constant 0 : index
        %129 = vector.load %arg4[%128, %c0_36, %c0_37] : memref<2x8x128xf32, #tpu.memory_space<vmem>>, vector<1x8x128xf32>
        %130 = vector.shape_cast %129 : vector<1x8x128xf32> to vector<8x128xf32>
        %131 = vector.shape_cast %121 : vector<8x128xf32> to vector<1x8x128xf32>
        tpu.vector_store %arg4[%128, %c0_36, %c0_37], %131 {strides = array<i32>} : memref<2x8x128xf32, #tpu.memory_space<vmem>>, vector<1x8x128xf32>,
      } else {
      }
    } else {
    }
    %true = arith.constant true
    %50 = arith.xori %47, %true : i1
    %51 = arith.extui %50 : i1 to i32
    %c0_i32_7 = arith.constant 0 : i32
    %52 = arith.cmpi ne, %51, %c0_i32_7 : i32
    scf.if %52 {
      %cst = arith.constant 0.000000e+00 : f32
      %96 = vector.broadcast %cst : f32 to vector<8x128xf32>
      %97 = arith.index_cast %c0_i32 : i32 to index
      %c0_30 = arith.constant 0 : index
      %c0_31 = arith.constant 0 : index
      %98 = vector.load %arg4[%97, %c0_30, %c0_31] : memref<2x8x128xf32, #tpu.memory_space<vmem>>, vector<1x8x128xf32>
      %99 = vector.shape_cast %98 : vector<1x8x128xf32> to vector<8x128xf32>
      %100 = vector.shape_cast %96 : vector<8x128xf32> to vector<1x8x128xf32>
      tpu.vector_store %arg4[%97, %c0_30, %c0_31], %100 {strides = array<i32>} : memref<2x8x128xf32, #tpu.memory_space<vmem>>, vector<1x8x128xf32>,
    } else {
    }
    %c1_i32 = arith.constant 1 : i32
    %c2_i32_8 = arith.constant 2 : i32
    %53 = arith.muli %arg0, %c2_i32_8 : i32
    %54 = arith.addi %53, %c1_i32 : i32
    %c0_9 = arith.constant 0 : index
    %55 = arith.index_cast %54 : i32 to index
    %56 = memref.load %arg2[%c0_9, %55] : memref<10x2xf32, #tpu.memory_space<smem>>
    %c1_10 = arith.constant 1 : index
    %57 = arith.index_cast %54 : i32 to index
    %58 = memref.load %arg2[%c1_10, %57] : memref<10x2xf32, #tpu.memory_space<smem>>
    %c2_11 = arith.constant 2 : index
    %59 = arith.index_cast %54 : i32 to index
    %60 = memref.load %arg2[%c2_11, %59] : memref<10x2xf32, #tpu.memory_space<smem>>
    %c3_12 = arith.constant 3 : index
    %61 = arith.index_cast %54 : i32 to index
    %62 = memref.load %arg2[%c3_12, %61] : memref<10x2xf32, #tpu.memory_space<smem>>
    %c4_13 = arith.constant 4 : index
    %63 = arith.index_cast %54 : i32 to index
    %64 = memref.load %arg2[%c4_13, %63] : memref<10x2xf32, #tpu.memory_space<smem>>
    %c5_14 = arith.constant 5 : index
    %65 = arith.index_cast %54 : i32 to index
    %66 = memref.load %arg2[%c5_14, %65] : memref<10x2xf32, #tpu.memory_space<smem>>
    %c6_15 = arith.constant 6 : index
    %67 = arith.index_cast %54 : i32 to index
    %68 = memref.load %arg2[%c6_15, %67] : memref<10x2xf32, #tpu.memory_space<smem>>
    %c7_16 = arith.constant 7 : index
    %69 = arith.index_cast %54 : i32 to index
    %70 = memref.load %arg2[%c7_16, %69] : memref<10x2xf32, #tpu.memory_space<smem>>
    %c8_17 = arith.constant 8 : index
    %71 = arith.index_cast %54 : i32 to index
    %72 = memref.load %arg2[%c8_17, %71] : memref<10x2xf32, #tpu.memory_space<smem>>
    %c9_18 = arith.constant 9 : index
    %73 = arith.index_cast %54 : i32 to index
    %74 = memref.load %arg2[%c9_18, %73] : memref<10x2xf32, #tpu.memory_space<smem>>
    %c0_19 = arith.constant 0 : index
    %75 = arith.index_cast %54 : i32 to index
    %76 = memref.load %arg3[%c0_19, %75] : memref<2x2xi32, #tpu.memory_space<smem>>
    %c1_20 = arith.constant 1 : index
    %77 = arith.index_cast %54 : i32 to index
    %78 = memref.load %arg3[%c1_20, %77] : memref<2x2xi32, #tpu.memory_space<smem>>
    %c0_i32_21 = arith.constant 0 : i32
    %79 = arith.addi %0, %c0_i32_21 : i32
    %c128_i32_22 = arith.constant 128 : i32
    %80 = arith.muli %79, %c128_i32_22 : i32
    %c1024_i32_23 = arith.constant 1024 : i32
    %81 = arith.addi %80, %c1024_i32_23 : i32
    %82 = arith.cmpi sle, %80, %78 : i32
    %83 = arith.cmpi sgt, %81, %76 : i32
    %84 = arith.andi %82, %83 : i1
    %c2048_i32_24 = arith.constant 2048 : i32
    %85 = arith.subi %78, %c2048_i32_24 : i32
    %86 = arith.cmpi sle, %80, %85 : i32
    %c2048_i32_25 = arith.constant 2048 : i32
    %87 = arith.subi %76, %c2048_i32_25 : i32
    %88 = arith.cmpi sgt, %81, %87 : i32
    %89 = arith.andi %86, %88 : i1
    %90 = arith.ori %84, %89 : i1
    %91 = arith.extui %90 : i1 to i32
    %c0_i32_26 = arith.constant 0 : i32
    %92 = arith.cmpi ne, %91, %c0_i32_26 : i32
    scf.if %92 {
      %96 = vector.broadcast %74 : f32 to vector<8x128xf32>
      %97 = arith.subf %9, %96 : vector<8x128xf32>
      %cst = arith.constant 0.000000e+00 : f32
      %98 = vector.broadcast %cst : f32 to vector<8x128xf32>
      %99 = arith.cmpf olt, %97, %98 : vector<8x128xf32>
      %cst_30 = arith.constant 2.048000e+03 : f32
      %100 = vector.broadcast %cst_30 : f32 to vector<8x128xf32>
      %101 = arith.addf %97, %100 : vector<8x128xf32>
      %102 = arith.select %99, %101, %97 : vector<8x128xi1>, vector<8x128xf32>
      %103 = vector.broadcast %62 : f32 to vector<8x128xf32>
      %104 = arith.mulf %103, %102 : vector<8x128xf32>
      %105 = vector.broadcast %64 : f32 to vector<8x128xf32>
      %106 = arith.addf %104, %105 : vector<8x128xf32>
      %107 = math.exp2 %106 : vector<8x128xf32>
      %cst_31 = arith.constant 1.000000e+00 : f32
      %108 = vector.broadcast %cst_31 : f32 to vector<8x128xf32>
      %109 = arith.subf %107, %108 : vector<8x128xf32>
      %110 = vector.broadcast %66 : f32 to vector<8x128xf32>
      %111 = arith.mulf %110, %109 : vector<8x128xf32>
      %112 = math.sin %111 : vector<8x128xf32>
      %113 = vector.broadcast %68 : f32 to vector<8x128xf32>
      %114 = arith.mulf %113, %102 : vector<8x128xf32>
      %115 = vector.broadcast %70 : f32 to vector<8x128xf32>
      %116 = arith.addf %114, %115 : vector<8x128xf32>
      %117 = arith.mulf %116, %116 : vector<8x128xf32>
      %118 = vector.broadcast %72 : f32 to vector<8x128xf32>
      %119 = arith.subf %118, %117 : vector<8x128xf32>
      %120 = math.exp2 %119 : vector<8x128xf32>
      %121 = arith.mulf %112, %120 : vector<8x128xf32>
      %cst_32 = arith.constant 0.000000e+00 : f32
      %122 = arith.cmpf ogt, %56, %cst_32 : f32
      %123 = arith.extui %122 : i1 to i32
      %c0_i32_33 = arith.constant 0 : i32
      %124 = arith.cmpi ne, %123, %c0_i32_33 : i32
      scf.if %124 {
        %128 = vector.broadcast %58 : f32 to vector<8x128xf32>
        %129 = arith.mulf %128, %102 : vector<8x128xf32>
        %130 = vector.broadcast %60 : f32 to vector<8x128xf32>
        %131 = arith.addf %129, %130 : vector<8x128xf32>
        %132 = math.sin %131 : vector<8x128xf32>
        %133 = arith.mulf %121, %132 : vector<8x128xf32>
        %134 = arith.index_cast %c1_i32 : i32 to index
        %c0_36 = arith.constant 0 : index
        %c0_37 = arith.constant 0 : index
        %135 = vector.load %arg4[%134, %c0_36, %c0_37] : memref<2x8x128xf32, #tpu.memory_space<vmem>>, vector<1x8x128xf32>
        %136 = vector.shape_cast %135 : vector<1x8x128xf32> to vector<8x128xf32>
        %137 = vector.shape_cast %133 : vector<8x128xf32> to vector<1x8x128xf32>
        tpu.vector_store %arg4[%134, %c0_36, %c0_37], %137 {strides = array<i32>} : memref<2x8x128xf32, #tpu.memory_space<vmem>>, vector<1x8x128xf32>,
      } else {
      }
      %cst_34 = arith.constant 0.000000e+00 : f32
      %125 = arith.cmpf ole, %56, %cst_34 : f32
      %126 = arith.extui %125 : i1 to i32
      %c0_i32_35 = arith.constant 0 : i32
      %127 = arith.cmpi ne, %126, %c0_i32_35 : i32
      scf.if %127 {
        %128 = arith.index_cast %c1_i32 : i32 to index
        %c0_36 = arith.constant 0 : index
        %c0_37 = arith.constant 0 : index
        %129 = vector.load %arg4[%128, %c0_36, %c0_37] : memref<2x8x128xf32, #tpu.memory_space<vmem>>, vector<1x8x128xf32>
        %130 = vector.shape_cast %129 : vector<1x8x128xf32> to vector<8x128xf32>
        %131 = vector.shape_cast %121 : vector<8x128xf32> to vector<1x8x128xf32>
        tpu.vector_store %arg4[%128, %c0_36, %c0_37], %131 {strides = array<i32>} : memref<2x8x128xf32, #tpu.memory_space<vmem>>, vector<1x8x128xf32>,
      } else {
      }
    } else {
    }
    %true_27 = arith.constant true
    %93 = arith.xori %90, %true_27 : i1
    %94 = arith.extui %93 : i1 to i32
    %c0_i32_28 = arith.constant 0 : i32
    %95 = arith.cmpi ne, %94, %c0_i32_28 : i32
    scf.if %95 {
      %cst = arith.constant 0.000000e+00 : f32
      %96 = vector.broadcast %cst : f32 to vector<8x128xf32>
      %97 = arith.index_cast %c1_i32 : i32 to index
      %c0_30 = arith.constant 0 : index
      %c0_31 = arith.constant 0 : index
      %98 = vector.load %arg4[%97, %c0_30, %c0_31] : memref<2x8x128xf32, #tpu.memory_space<vmem>>, vector<1x8x128xf32>
      %99 = vector.shape_cast %98 : vector<1x8x128xf32> to vector<8x128xf32>
      %100 = vector.shape_cast %96 : vector<8x128xf32> to vector<1x8x128xf32>
      tpu.vector_store %arg4[%97, %c0_30, %c0_31], %100 {strides = array<i32>} : memref<2x8x128xf32, #tpu.memory_space<vmem>>, vector<1x8x128xf32>,
    } else {
    }
    %c2_i32_29 = arith.constant 2 : i32
    return
  }
  func.func @transform_0(%arg0: i32, %arg1: i32) -> (i32, i32) {
    %c0_i32 = arith.constant 0 : i32
    %c0_i32_0 = arith.constant 0 : i32
    %c0_i32_1 = arith.constant 0 : i32
    return %c0_i32, %c0_i32_0 : i32, i32
  }
  func.func @transform_1(%arg0: i32, %arg1: i32) -> (i32, i32) {
    %c0_i32 = arith.constant 0 : i32
    %c0_i32_0 = arith.constant 0 : i32
    %c0_i32_1 = arith.constant 0 : i32
    return %c0_i32, %c0_i32_0 : i32, i32
  }
  func.func @transform_2(%arg0: i32, %arg1: i32) -> (i32, i32, i32) {
    %c0_i32 = arith.constant 0 : i32
    %c0_i32_0 = arith.constant 0 : i32
    return %arg0, %arg1, %c0_i32 : i32, i32, i32
  }
}

</mosaic_0001>

<llo_original>
// kernel: tpu_custom_call.1
$region0: #{tpu_custom_call.1}
  #allocation0 [shape = 'u32[]', space=smem, size = 0x4, offset = 0x4, fixed_abs, tag = 'smem constant byte address 0x4 - core index']
  #allocation1 [shape = 'u32[144,128]{1,0:T(1,128)}', space=vmem, size = 0x12000, scoped, tag = 'internal scratch']
  %s0 = inlined_call_operand.vmem [shape: f32[10,2], index: 0, kind: input, shape index: {}]
  %s1 = inlined_call_operand.vmem [shape: s32[2,2], index: 1, kind: input, shape index: {}]
  %s2 = inlined_call_operand.hbm [shape: f32[2,16,128], index: 2, kind: output, shape index: {}]
  %s3 = sld [smem:[#allocation0]]
  $region81: #{tpu_custom_call.1} parent=0
    _
  %s5 = ssub.s32 1, %s3
  %s6 = scalar_select 0, %s5, %s3
  $region1: #{tpu_custom_call.1} parent=0
    #allocation2 [shape = 'u8[8192]{0}', space=smem, size = 0x2000, scoped, tag = 'input window, operand 0, single buffered']
    #allocation3 [shape = 's32[2]{0}', space=sflag, size = 0x8, scoped, tag = 'scoped memory for tpu_custom_call.1']
    #allocation4 [shape = 's32[2]{0}', space=sflag, size = 0x8, scoped, tag = 'scoped memory for tpu_custom_call.1']
    #allocation5 [shape = 'u8[1024]{0}', space=smem, size = 0x400, scoped, tag = 'input window, operand 1, single buffered']
    #allocation6 [shape = 's32[1]{0}', space=sflag, size = 0x4, scoped, tag = 'scoped memory for tpu_custom_call.1']
    #allocation7 [shape = 'u8[16384]{0}', space=vmem, size = 0x4000, scoped, tag = 'output window, operand 0']
    %7 = vsyncpa [#allocation4], 0
    %8 = vsyncpa [#allocation6], 0
    %9 = vsyncpa [#allocation3], 0
    %s10 = scalar_lea.sflag [#allocation3], 1
    %11 = vsyncpa %s10, 0
    loop: start=0, step=1, limit=4
    $region2: #{tpu_custom_call.1} parent=1 // loop_pre_header
      _
    $region3: #{tpu_custom_call.1} parent=1 // loop_header
      %s13 = sphi 0, %s17
      %p14 = scmp.ge.s32.totalorder %s13, 4
      %s20 = sphi 0, %s32
      %s21 = sphi 0, %s28
      %s22 = sphi 0, %s20
      %s23 = sphi 0, %s21
      %s24 = sphi 0, %s22
      %s25 = sphi 0, %s23
      %s33 = sphi 0, %s33
      %s35 = sphi 0, %s33
      %s36 = sphi 0, %s35
      %s50 = sphi 0, %s36
      %s54 = sphi 0, %s54
      %s56 = sphi 0, %s54
      %s57 = sphi 0, %s56
      %s71 = sphi 0, %s57
      %s79 = sphi 0, %s81
      %s82 = sphi 0, %s79
      %s83 = sphi 0, %s82
      %s99 = sphi 0, %s83
    $region4: #{tpu_custom_call.1} parent=1 // loop_header_branch
      %16 = sbr.rel (%p14) target = $region8
    $region5: #{tpu_custom_call.1} parent=1 // loop_body
      %s18 = ssub.s32 %s13, 1
      %s19 = ssub.s32 %s13, 2
      %s26 = sadd.s32 1, %s21
      %p27 = scmp.ge.s32.totalorder %s26, 2
      %s28 = scalar_select %p27, 0, %s26
      %s29 = sadd.s32 1, %s20
      %s30 = scalar_select %p27, %s29, %s20
      %p31 = scmp.ge.s32.totalorder %s30, 1
      %s32 = scalar_select %p31, 0, %s30
      %s34 = sadd.s32 %s33, 1
      %p37 = scmp.eq.s32.totalorder %s13, 1
      %p38 = scmp.ne.s32.totalorder %s33, %s35
      %p39 = scmp.eq.s32.totalorder %s13, 0
      %p40 = por %p38, %p39
      %p41 = scmp.ne.s32.totalorder %s33, %s35
      %p42 = scmp.eq.s32.totalorder %s18, 1
      %p43 = por %p41, %p42
      %p44 = scmp.ne.s32.totalorder %s35, %s36
      %p45 = scmp.eq.s32.totalorder %s18, 0
      %p46 = por %p44, %p45
      %p47 = scmp.ne.s32.totalorder %s35, %s36
      %p48 = scmp.eq.s32.totalorder %s19, 1
      %p49 = por %p47, %p48
      %p51 = scmp.ne.s32.totalorder %s36, %s50
      %p52 = scmp.eq.s32.totalorder %s19, 0
      %p53 = por %p51, %p52
      %s55 = sadd.s32 %s54, 1
      %p58 = scmp.eq.s32.totalorder %s13, 1
      %p59 = scmp.ne.s32.totalorder %s54, %s56
      %p60 = scmp.eq.s32.totalorder %s13, 0
      %p61 = por %p59, %p60
      %p62 = scmp.ne.s32.totalorder %s54, %s56
      %p63 = scmp.eq.s32.totalorder %s18, 1
      %p64 = por %p62, %p63
      %p65 = scmp.ne.s32.totalorder %s56, %s57
      %p66 = scmp.eq.s32.totalorder %s18, 0
      %p67 = por %p65, %p66
      %p68 = scmp.ne.s32.totalorder %s56, %s57
      %p69 = scmp.eq.s32.totalorder %s19, 1
      %p70 = por %p68, %p69
      %p72 = scmp.ne.s32.totalorder %s57, %s71
      %p73 = scmp.eq.s32.totalorder %s19, 0
      %p74 = por %p72, %p73
      %s75 = ssub.s32 %s20, %s32
      %s76 = ssub.s32 %s21, %s28
      %s77 = sor.u32 %s75, %s76
      %p78 = scmp.eq.s32.totalorder %s77, 0
      %s80 = sadd.s32 %s79, 1
      %s81 = scalar_select %p78, %s79, %s80
      %p84 = pneg %p78
      %p85 = scmp.eq.s32.totalorder %s13, 1
      %p86 = por %p84, %p85
      %p87 = scmp.ne.s32.totalorder %s79, %s82
      %p88 = scmp.eq.s32.totalorder %s13, 0
      %p89 = por %p87, %p88
      %p90 = scmp.ne.s32.totalorder %s79, %s82
      %p91 = scmp.eq.s32.totalorder %s18, 1
      %p92 = por %p90, %p91
      %p93 = scmp.ne.s32.totalorder %s82, %s83
      %p94 = scmp.eq.s32.totalorder %s18, 0
      %p95 = por %p93, %p94
      %p96 = scmp.ne.s32.totalorder %s82, %s83
      %p97 = scmp.eq.s32.totalorder %s19, 1
      %p98 = por %p96, %p97
      %p100 = scmp.ne.s32.totalorder %s83, %s99
      %p101 = scmp.eq.s32.totalorder %s19, 0
      %p102 = por %p100, %p101
      %p103 = scmp.le.s32.totalorder 1, %s13
      %p104 = scmp.lt.s32.totalorder %s13, 3
      %p105 = pnand %p103, %p104
      %p106 = pneg %p105
      // Predicated region
      $region9: #{tpu_custom_call.1} parent=5 // pred_check
        _
      $region10: #{tpu_custom_call.1} parent=5 // pred_check_branch
        %108 = sbr.rel (%p105) target = $region12
      $region11: #{tpu_custom_call.1} parent=5 // pred_region
        %s109 = ssub.s32 %s13, 1
        // Predicated region
        $region13: #{tpu_custom_call.1} parent=11 // pred_check
          %p110 = pneg %p46
        $region14: #{tpu_custom_call.1} parent=11 // pred_check_branch
          %112 = sbr.rel (%p110) target = $region16
        $region15: #{tpu_custom_call.1} parent=11 // pred_region
          %s114 = ssub.s32 256, 256
          %115 = vsyncadd [#allocation4], %s114
          %s116 = sshll.u32 %s0, 4
          %s117 = int_to_ptr.vmem [resolvable:$true] %s116
          %122 = dma.vmem_to_smem %s117, 256, [#allocation2], [#allocation4], 128, 128, 8
        $region16: #{tpu_custom_call.1} parent=11 // pred_fallthru
          _
        // Predicated region
        $region17: #{tpu_custom_call.1} parent=11 // pred_check
          %p123 = pneg %p67
        $region18: #{tpu_custom_call.1} parent=11 // pred_check_branch
          %125 = sbr.rel (%p123) target = $region20
        $region19: #{tpu_custom_call.1} parent=11 // pred_region
          %s127 = ssub.s32 32, 32
          %128 = vsyncadd [#allocation6], %s127
          %s130 = sshll.u32 %s1, 4
          %s131 = int_to_ptr.vmem [resolvable:$true] %s130
          %133 = dma.vmem_to_smem %s131, 32, [#allocation5], [#allocation6]
        $region20: #{tpu_custom_call.1} parent=11 // pred_fallthru
          _
      $region12: #{tpu_custom_call.1} parent=5 // pred_fallthru
        _
      %p134 = scmp.lt.s32.totalorder %s13, 2
      // Predicated region
      $region21: #{tpu_custom_call.1} parent=5 // pred_check
        %p135 = pneg %p134
      $region22: #{tpu_custom_call.1} parent=5 // pred_check_branch
        %137 = sbr.rel (%p135) target = $region24
      $region23: #{tpu_custom_call.1} parent=5 // pred_region
        _
      $region24: #{tpu_custom_call.1} parent=5 // pred_fallthru
        _
      %p138 = scmp.le.s32.totalorder 1, %s13
      %p139 = scmp.lt.s32.totalorder %s13, 3
      %p140 = pnand %p138, %p139
      %p141 = pneg %p140
      // Predicated region
      $region25: #{tpu_custom_call.1} parent=5 // pred_check
        _
      $region26: #{tpu_custom_call.1} parent=5 // pred_check_branch
        %143 = sbr.rel (%p140) target = $region28
      $region27: #{tpu_custom_call.1} parent=5 // pred_region
        %s144 = ssub.s32 %s13, 1
        // Predicated region
        $region29: #{tpu_custom_call.1} parent=27 // pred_check
          %p145 = pneg %p46
        $region30: #{tpu_custom_call.1} parent=27 // pred_check_branch
          %147 = sbr.rel (%p145) target = $region32
        $region31: #{tpu_custom_call.1} parent=27 // pred_region
          %148 = dma.done [#allocation4], 256
        $region32: #{tpu_custom_call.1} parent=27 // pred_fallthru
          _
        // Predicated region
        $region33: #{tpu_custom_call.1} parent=27 // pred_check
          %p149 = pneg %p67
        $region34: #{tpu_custom_call.1} parent=27 // pred_check_branch
          %151 = sbr.rel (%p149) target = $region36
        $region35: #{tpu_custom_call.1} parent=27 // pred_region
          %152 = dma.done [#allocation6], 32
        $region36: #{tpu_custom_call.1} parent=27 // pred_fallthru
          _
        %153 = sfence
        %p154 = pneg %p46
        %p155 = pneg %p43
        %p156 = pneg %p67
        %p157 = pneg %p64
        %p158 = pneg %p95
        %p159 = pneg %p92
        %s160 = sand.u32 %s82, 1
        %s161 = scalar_lea.sflag [#allocation3], %s160
        %s162 = sand.u32 %s82, 1
        %s163 = smul.addr %s162, 16
        %s164 = scalar_lea.vmem [#allocation7], %s163
        %s165 = smul.u32 2, %s22
        %v166 = vlaneseq
        %v167 = vshrl.u32 %v166, 7
        %v168 = vlaneseq
        %v169 = vand.u32 %v168, 127
        %s170 = smul.u32 %s23, 1024
        %v171 = vmul.u32 %v167, 128
        %v172 = vstv %s170
        %v173 = vadd.s32 %v172, %v171
        %v174 = vadd.s32 %v173, %v169
        %v175 = vcvt.s32.f32 %v174
        %s176 = smul.u32 %s22, 2
        %s177 = sld [smem:[#allocation2 + %s176]]
        %s178 = sshra.s32 %s176, 7
        %s179 = sand.u32 %s176, 127
        %s180 = sadd.s32 %s178, 1
        %s181 = smul.u32 %s180, 128
        %s182 = sshra.s32 %s176, 7
        %s183 = sand.u32 %s176, 127
        %s184 = sadd.s32 %s181, %s183
        %s185 = sld [smem:[#allocation2 + %s184]]
        %s186 = sadd.s32 %s178, 2
        %s187 = smul.u32 %s186, 128
        %s188 = sadd.s32 %s187, %s183
        %s189 = sld [smem:[#allocation2 + %s188]]
        %s190 = sadd.s32 %s178, 3
        %s191 = smul.u32 %s190, 128
        %s192 = sadd.s32 %s191, %s183
        %s193 = sld [smem:[#allocation2 + %s192]]
        %s194 = sadd.s32 %s178, 4
        %s195 = smul.u32 %s194, 128
        %s196 = sadd.s32 %s195, %s183
        %s197 = sld [smem:[#allocation2 + %s196]]
        %s198 = sadd.s32 %s178, 5
        %s199 = smul.u32 %s198, 128
        %s200 = sadd.s32 %s199, %s183
        %s201 = sld [smem:[#allocation2 + %s200]]
        %s202 = sadd.s32 %s178, 6
        %s203 = smul.u32 %s202, 128
        %s204 = sadd.s32 %s203, %s183
        %s205 = sld [smem:[#allocation2 + %s204]]
        %s206 = sadd.s32 %s178, 7
        %s207 = smul.u32 %s206, 128
        %s208 = sadd.s32 %s207, %s183
        %s209 = sld [smem:[#allocation2 + %s208]]
        %s210 = sadd.s32 %s178, 8
        %s211 = smul.u32 %s210, 128
        %s212 = sadd.s32 %s211, %s183
        %s213 = sld [smem:[#allocation2 + %s212]]
        %s214 = sadd.s32 %s178, 9
        %s215 = smul.u32 %s214, 128
        %s216 = sadd.s32 %s215, %s183
        %s217 = sld [smem:[#allocation2 + %s216]]
        %s218 = sld [smem:[#allocation5 + %s176]]
        %s219 = sld [smem:[#allocation5 + %s184]]
        %s220 = sadd.s32 %s170, 1024
        %p221 = scmp.le.s32.totalorder %s170, %s219
        %p222 = scmp.gt.s32.totalorder %s220, %s218
        %p223 = pnand %p221, %p222
        %p224 = pneg %p223
        %s225 = ssub.s32 %s219, 2048
        %p226 = scmp.le.s32.totalorder %s170, %s225
        %s227 = ssub.s32 %s218, 2048
        %p228 = scmp.gt.s32.totalorder %s220, %s227
        %p229 = pnand %p226, %p228
        %p230 = pneg %p229
        %p231 = por %p224, %p230
        // Predicated region
        $region37: #{tpu_custom_call.1} parent=27 // pred_check
          %p232 = pneg %p231
        $region38: #{tpu_custom_call.1} parent=27 // pred_check_branch
          %234 = sbr.rel (%p232) target = $region40
        $region39: #{tpu_custom_call.1} parent=27 // pred_region
          %v235 = vstv %s217
          %v236 = vsub.f32 %v175, %v235
          %vm237 = vcmp.lt.f32.partialorder %v236, 0.0
          %v238 = vadd.f32 %v236, 2048.0
          %v239 = vsel %vm237, %v238, %v236
          %v240 = vstv %s193
          %v241 = vmul.f32 %v240, %v239
          %v242 = vstv %s197
          %v243 = vadd.f32 %v241, %v242
          %v244 = vpow.pop %v243
          %v245 = vsub.f32 %v244, 1.0
          %v246 = vstv %s201
          %v247 = vmul.f32 %v246, %v245
          %v248 = vand.u32 2147483647, %v247
          %vm249 = vcmp.le.f32.partialorder %v248, 0.7853982
          %vm250 = vcmp.lt.s32.totalorder %v247, 0
          %v251 = vand.u32 %v247, 2139095040
          %v252 = vshrl.u32 %v251, 23
          %v253 = vsub.s32 %v252, 127
          %v254 = vand.u32 2147483647, %v247
          %v255 = vand.u32 %v254, 8388607
          %v256 = vor.u32 %v255, 8388608
          %v257 = vsub.s32 0, %v256
          %v258 = vadd.s32 %v253, 1
          %vm259 = vcmp.gt.s32.totalorder %v258, 0
          %v260 = vsel %vm259, %v258, 0
          %v261 = vshrl.u32 %v260, 5
          %v262 = vand.u32 %v260, 31
          %v263 = vsub.s32 32, %v262
          %v264 = vshrl.u32 683565275, %v263
          %v265 = vshll.u32 683565275, %v262
          %v266 = vshrl.u32 2475754826, %v263
          %v267 = vor.u32 %v265, %v266
          %v268 = vshll.u32 2475754826, %v262
          %v269 = vshrl.u32 2131351028, %v263
          %v270 = vor.u32 %v268, %v269
          %v271 = vshll.u32 2131351028, %v262
          %v272 = vshrl.u32 2102212464, %v263
          %v273 = vor.u32 %v271, %v272
          %v274 = vshll.u32 2102212464, %v262
          %v275 = vshrl.u32 920167782, %v263
          %v276 = vor.u32 %v274, %v275
          %v277 = vshll.u32 920167782, %v262
          %v278 = vshrl.u32 1326507024, %v263
          %v279 = vor.u32 %v277, %v278
          %vm280 = vcmp.lt.s32.totalorder %v261, 1
          %vm281 = vcmp.lt.s32.totalorder %v261, 2
          %vm282 = vcmp.lt.s32.totalorder %v261, 3
          %vm283 = vcmp.lt.s32.totalorder %v261, 4
          %v284 = vsel %vm280, %v264, %v267
          %v285 = vsel %vm283, %v273, 2102212464
          %v286 = vsel %vm282, %v270, %v285
          %v287 = vsel %vm281, %v284, %v286
          %v288 = vsel %vm280, %v267, %v270
          %v289 = vsel %vm283, %v276, 920167782
          %v290 = vsel %vm282, %v273, %v289
          %v291 = vsel %vm281, %v288, %v290
          %v292 = vsel %vm280, %v270, %v273
          %v293 = vsel %vm283, %v279, 1326507024
          %v294 = vsel %vm282, %v276, %v293
          %v295 = vsel %vm281, %v292, %v294
          %v296 = vshll.u32 %v256, 8
          %v297 = vmul.u32.u64.compose %v296, %v295
          %v298 = vextract.low.u32 %v297
          %v299 = vextract.high.u32 %v297
          %v300 = vmul.u32.u64.compose %v296, %v291
          %v301 = vextract.low.u32 %v300
          %v302 = vextract.high.u32 %v300
          %v303 = vmul.u32 %v296, %v287
          %v304 = vadd.s32 %v299, %v301
          %vm305 = vc.u32 %v299, %v301
          %v306 = vadd.s32 %v302, 1
          %v307 = vsel %vm305, %v306, %v302
          %v308 = vadd.s32 %v303, %v307
          %v309 = vadd.s32 %v308, 536870912
          %v310 = vshrl.u32 %v309, 30
          %v311 = vshll.u32 %v310, 30
          %v312 = vsub.s32 %v308, %v311
          %vm313 = vcmp.lt.s32.totalorder %v312, 0
          %v314 = vsub.s32 0, %v312
          %v315 = vsel %vm313, %v314, %v312
          %v316 = vclz %v315
          %v317 = vsub.s32 %v316, 2
          %vm318 = vcmp.gt.s32.totalorder 0, %v317
          %v319 = vsel %vm318, 0, %v317
          %v320 = vsub.s32 32, %v319
          %v321 = vshll.u32 %v312, %v319
          %v322 = vshrl.u32 %v304, %v320
          %v323 = vor.u32 %v321, %v322
          %v324 = vsub.s32 4294967266, %v319
          %v325 = vadd.s32 %v324, 127
          %v326 = vshll.u32 %v325, 23
          %v327 = vor.u32 4788187, %v326
          %v328 = vand.u32 2147483647, %v327
          %v330 = vcvt.s32.f32 %v323
          %v331 = vmul.f32 %v330, %v328
          %v332 = vxor.u32 %v331, 2147483648
          %v333 = vsel %vm250, %v332, %v331
          %v334 = vsub.s32 4, %v310
          %v335 = vsel %vm250, %v334, %v310
          %v336 = vsel %vm249, %v247, %v333
          %v337 = vsel %vm249, 0, %v335
          %v338 = vcosq.f32.pop %v336
          %v339 = vsinq.f32.pop %v336
          %vm340 = vweird.f32 %v247
          %v341 = vadd.s32 %v337, 3
          %v342 = vand.u32 %v341, 3
          %vm343 = vcmp.lt.s32.totalorder %v342, 2
          %vm344 = vcmp.eq.s32.totalorder %v342, 0
          %v345 = vxor.u32 %v339, 2147483648
          %v346 = vsel %vm344, %v338, %v345
          %vm347 = vcmp.eq.s32.totalorder %v342, 2
          %v348 = vxor.u32 %v338, 2147483648
          %v349 = vsel %vm347, %v348, %v339
          %v350 = vsel %vm343, %v346, %v349
          %v351 = vsel %vm340, nan, %v350
          %v352 = vstv %s205
          %v353 = vmul.f32 %v352, %v239
          %v354 = vstv %s209
          %v355 = vadd.f32 %v353, %v354
          %v356 = vmul.f32 %v355, %v355
          %v357 = vstv %s213
          %v358 = vsub.f32 %v357, %v356
          %v359 = vpow.pop %v358
          %v360 = vmul.f32 %v351, %v359
          %p361 = scmp.gt.f32.partialorder %s177, 0.0
          // Predicated region
          $region41: #{tpu_custom_call.1} parent=39 // pred_check
            %p362 = pneg %p361
          $region42: #{tpu_custom_call.1} parent=39 // pred_check_branch
            %364 = sbr.rel (%p362) target = $region44
          $region43: #{tpu_custom_call.1} parent=39 // pred_region
            %v365 = vstv %s185
            %v366 = vmul.f32 %v365, %v239
            %v367 = vstv %s189
            %v368 = vadd.f32 %v366, %v367
            %v369 = vand.u32 2147483647, %v368
            %vm370 = vcmp.le.f32.partialorder %v369, 0.7853982
            %vm371 = vcmp.lt.s32.totalorder %v368, 0
            %v372 = vand.u32 %v368, 2139095040
            %v373 = vshrl.u32 %v372, 23
            %v374 = vsub.s32 %v373, 127
            %v375 = vand.u32 2147483647, %v368
            %v376 = vand.u32 %v375, 8388607
            %v377 = vor.u32 %v376, 8388608
            %v378 = vsub.s32 0, %v377
            %v379 = vadd.s32 %v374, 1
            %vm380 = vcmp.gt.s32.totalorder %v379, 0
            %v381 = vsel %vm380, %v379, 0
            %v382 = vshrl.u32 %v381, 5
            %v383 = vand.u32 %v381, 31
            %v384 = vsub.s32 32, %v383
            %v385 = vshrl.u32 683565275, %v384
            %v386 = vshll.u32 683565275, %v383
            %v387 = vshrl.u32 2475754826, %v384
            %v388 = vor.u32 %v386, %v387
            %v389 = vshll.u32 2475754826, %v383
            %v390 = vshrl.u32 2131351028, %v384
            %v391 = vor.u32 %v389, %v390
            %v392 = vshll.u32 2131351028, %v383
            %v393 = vshrl.u32 2102212464, %v384
            %v394 = vor.u32 %v392, %v393
            %v395 = vshll.u32 2102212464, %v383
            %v396 = vshrl.u32 920167782, %v384
            %v397 = vor.u32 %v395, %v396
            %v398 = vshll.u32 920167782, %v383
            %v399 = vshrl.u32 1326507024, %v384
            %v400 = vor.u32 %v398, %v399
            %vm401 = vcmp.lt.s32.totalorder %v382, 1
            %vm402 = vcmp.lt.s32.totalorder %v382, 2
            %vm403 = vcmp.lt.s32.totalorder %v382, 3
            %vm404 = vcmp.lt.s32.totalorder %v382, 4
            %v405 = vsel %vm401, %v385, %v388
            %v406 = vsel %vm404, %v394, 2102212464
            %v407 = vsel %vm403, %v391, %v406
            %v408 = vsel %vm402, %v405, %v407
            %v409 = vsel %vm401, %v388, %v391
            %v410 = vsel %vm404, %v397, 920167782
            %v411 = vsel %vm403, %v394, %v410
            %v412 = vsel %vm402, %v409, %v411
            %v413 = vsel %vm401, %v391, %v394
            %v414 = vsel %vm404, %v400, 1326507024
            %v415 = vsel %vm403, %v397, %v414
            %v416 = vsel %vm402, %v413, %v415
            %v417 = vshll.u32 %v377, 8
            %v418 = vmul.u32.u64.compose %v417, %v416
            %v419 = vextract.low.u32 %v418
            %v420 = vextract.high.u32 %v418
            %v421 = vmul.u32.u64.compose %v417, %v412
            %v422 = vextract.low.u32 %v421
            %v423 = vextract.high.u32 %v421
            %v424 = vmul.u32 %v417, %v408
            %v425 = vadd.s32 %v420, %v422
            %vm426 = vc.u32 %v420, %v422
            %v427 = vadd.s32 %v423, 1
            %v428 = vsel %vm426, %v427, %v423
            %v429 = vadd.s32 %v424, %v428
            %v430 = vadd.s32 %v429, 536870912
            %v431 = vshrl.u32 %v430, 30
            %v432 = vshll.u32 %v431, 30
            %v433 = vsub.s32 %v429, %v432
            %vm434 = vcmp.lt.s32.totalorder %v433, 0
            %v435 = vsub.s32 0, %v433
            %v436 = vsel %vm434, %v435, %v433
            %v437 = vclz %v436
            %v438 = vsub.s32 %v437, 2
            %vm439 = vcmp.gt.s32.totalorder 0, %v438
            %v440 = vsel %vm439, 0, %v438
            %v441 = vsub.s32 32, %v440
            %v442 = vshll.u32 %v433, %v440
            %v443 = vshrl.u32 %v425, %v441
            %v444 = vor.u32 %v442, %v443
            %v445 = vsub.s32 4294967266, %v440
            %v446 = vadd.s32 %v445, 127
            %v447 = vshll.u32 %v446, 23
            %v448 = vor.u32 4788187, %v447
            %v449 = vand.u32 2147483647, %v448
            %v451 = vcvt.s32.f32 %v444
            %v452 = vmul.f32 %v451, %v449
            %v453 = vxor.u32 %v452, 2147483648
            %v454 = vsel %vm371, %v453, %v452
            %v455 = vsub.s32 4, %v431
            %v456 = vsel %vm371, %v455, %v431
            %v457 = vsel %vm370, %v368, %v454
            %v458 = vsel %vm370, 0, %v456
            %v459 = vcosq.f32.pop %v457
            %v460 = vsinq.f32.pop %v457
            %vm461 = vweird.f32 %v368
            %v462 = vadd.s32 %v458, 3
            %v463 = vand.u32 %v462, 3
            %vm464 = vcmp.lt.s32.totalorder %v463, 2
            %vm465 = vcmp.eq.s32.totalorder %v463, 0
            %v466 = vxor.u32 %v460, 2147483648
            %v467 = vsel %vm465, %v459, %v466
            %vm468 = vcmp.eq.s32.totalorder %v463, 2
            %v469 = vxor.u32 %v459, 2147483648
            %v470 = vsel %vm468, %v469, %v460
            %v471 = vsel %vm464, %v467, %v470
            %v472 = vsel %vm461, nan, %v471
            %v473 = vmul.f32 %v360, %v472
            %474 = vst [vmem:[%s164] sm:$0xff] %v473
          $region44: #{tpu_custom_call.1} parent=39 // pred_fallthru
            _
          %p475 = scmp.le.f32.partialorder %s177, 0.0
          // Predicated region
          $region45: #{tpu_custom_call.1} parent=39 // pred_check
            %p476 = pneg %p475
          $region46: #{tpu_custom_call.1} parent=39 // pred_check_branch
            %478 = sbr.rel (%p476) target = $region48
          $region47: #{tpu_custom_call.1} parent=39 // pred_region
            %479 = vst [vmem:[%s164] sm:$0xff] %v360
          $region48: #{tpu_custom_call.1} parent=39 // pred_fallthru
            _
        $region40: #{tpu_custom_call.1} parent=27 // pred_fallthru
          _
        %p480 = pneg %p231
        // Predicated region
        $region49: #{tpu_custom_call.1} parent=27 // pred_check
          _
        $region50: #{tpu_custom_call.1} parent=27 // pred_check_branch
          %482 = sbr.rel (%p231) target = $region52
        $region51: #{tpu_custom_call.1} parent=27 // pred_region
          %483 = vst [vmem:[%s164] sm:$0xff] 0.0
        $region52: #{tpu_custom_call.1} parent=27 // pred_fallthru
          _
        %s484 = sadd.s32 %s176, 1
        %s485 = sld [smem:[#allocation2 + %s484]]
        %s486 = sshra.s32 %s484, 7
        %s487 = sand.u32 %s484, 127
        %s488 = sadd.s32 %s486, 1
        %s489 = smul.u32 %s488, 128
        %s490 = sshra.s32 %s484, 7
        %s491 = sand.u32 %s484, 127
        %s492 = sadd.s32 %s489, %s491
        %s493 = sld [smem:[#allocation2 + %s492]]
        %s494 = sadd.s32 %s486, 2
        %s495 = smul.u32 %s494, 128
        %s496 = sadd.s32 %s495, %s491
        %s497 = sld [smem:[#allocation2 + %s496]]
        %s498 = sadd.s32 %s486, 3
        %s499 = smul.u32 %s498, 128
        %s500 = sadd.s32 %s499, %s491
        %s501 = sld [smem:[#allocation2 + %s500]]
        %s502 = sadd.s32 %s486, 4
        %s503 = smul.u32 %s502, 128
        %s504 = sadd.s32 %s503, %s491
        %s505 = sld [smem:[#allocation2 + %s504]]
        %s506 = sadd.s32 %s486, 5
        %s507 = smul.u32 %s506, 128
        %s508 = sadd.s32 %s507, %s491
        %s509 = sld [smem:[#allocation2 + %s508]]
        %s510 = sadd.s32 %s486, 6
        %s511 = smul.u32 %s510, 128
        %s512 = sadd.s32 %s511, %s491
        %s513 = sld [smem:[#allocation2 + %s512]]
        %s514 = sadd.s32 %s486, 7
        %s515 = smul.u32 %s514, 128
        %s516 = sadd.s32 %s515, %s491
        %s517 = sld [smem:[#allocation2 + %s516]]
        %s518 = sadd.s32 %s486, 8
        %s519 = smul.u32 %s518, 128
        %s520 = sadd.s32 %s519, %s491
        %s521 = sld [smem:[#allocation2 + %s520]]
        %s522 = sadd.s32 %s486, 9
        %s523 = smul.u32 %s522, 128
        %s524 = sadd.s32 %s523, %s491
        %s525 = sld [smem:[#allocation2 + %s524]]
        %s526 = sld [smem:[#allocation5 + %s484]]
        %s527 = sld [smem:[#allocation5 + %s492]]
        %p528 = scmp.le.s32.totalorder %s170, %s527
        %p529 = scmp.gt.s32.totalorder %s220, %s526
        %p530 = pnand %p528, %p529
        %p531 = pneg %p530
        %s532 = ssub.s32 %s527, 2048
        %p533 = scmp.le.s32.totalorder %s170, %s532
        %s534 = ssub.s32 %s526, 2048
        %p535 = scmp.gt.s32.totalorder %s220, %s534
        %p536 = pnand %p533, %p535
        %p537 = pneg %p536
        %p538 = por %p531, %p537
        // Predicated region
        $region53: #{tpu_custom_call.1} parent=27 // pred_check
          %p539 = pneg %p538
        $region54: #{tpu_custom_call.1} parent=27 // pred_check_branch
          %541 = sbr.rel (%p539) target = $region56
        $region55: #{tpu_custom_call.1} parent=27 // pred_region
          %v542 = vstv %s525
          %v543 = vsub.f32 %v175, %v542
          %vm544 = vcmp.lt.f32.partialorder %v543, 0.0
          %v545 = vadd.f32 %v543, 2048.0
          %v546 = vsel %vm544, %v545, %v543
          %v547 = vstv %s501
          %v548 = vmul.f32 %v547, %v546
          %v549 = vstv %s505
          %v550 = vadd.f32 %v548, %v549
          %v551 = vpow.pop %v550
          %v552 = vsub.f32 %v551, 1.0
          %v553 = vstv %s509
          %v554 = vmul.f32 %v553, %v552
          %v555 = vand.u32 2147483647, %v554
          %vm556 = vcmp.le.f32.partialorder %v555, 0.7853982
          %vm557 = vcmp.lt.s32.totalorder %v554, 0
          %v558 = vand.u32 %v554, 2139095040
          %v559 = vshrl.u32 %v558, 23
          %v560 = vsub.s32 %v559, 127
          %v561 = vand.u32 2147483647, %v554
          %v562 = vand.u32 %v561, 8388607
          %v563 = vor.u32 %v562, 8388608
          %v564 = vsub.s32 0, %v563
          %v565 = vadd.s32 %v560, 1
          %vm566 = vcmp.gt.s32.totalorder %v565, 0
          %v567 = vsel %vm566, %v565, 0
          %v568 = vshrl.u32 %v567, 5
          %v569 = vand.u32 %v567, 31
          %v570 = vsub.s32 32, %v569
          %v571 = vshrl.u32 683565275, %v570
          %v572 = vshll.u32 683565275, %v569
          %v573 = vshrl.u32 2475754826, %v570
          %v574 = vor.u32 %v572, %v573
          %v575 = vshll.u32 2475754826, %v569
          %v576 = vshrl.u32 2131351028, %v570
          %v577 = vor.u32 %v575, %v576
          %v578 = vshll.u32 2131351028, %v569
          %v579 = vshrl.u32 2102212464, %v570
          %v580 = vor.u32 %v578, %v579
          %v581 = vshll.u32 2102212464, %v569
          %v582 = vshrl.u32 920167782, %v570
          %v583 = vor.u32 %v581, %v582
          %v584 = vshll.u32 920167782, %v569
          %v585 = vshrl.u32 1326507024, %v570
          %v586 = vor.u32 %v584, %v585
          %vm587 = vcmp.lt.s32.totalorder %v568, 1
          %vm588 = vcmp.lt.s32.totalorder %v568, 2
          %vm589 = vcmp.lt.s32.totalorder %v568, 3
          %vm590 = vcmp.lt.s32.totalorder %v568, 4
          %v591 = vsel %vm587, %v571, %v574
          %v592 = vsel %vm590, %v580, 2102212464
          %v593 = vsel %vm589, %v577, %v592
          %v594 = vsel %vm588, %v591, %v593
          %v595 = vsel %vm587, %v574, %v577
          %v596 = vsel %vm590, %v583, 920167782
          %v597 = vsel %vm589, %v580, %v596
          %v598 = vsel %vm588, %v595, %v597
          %v599 = vsel %vm587, %v577, %v580
          %v600 = vsel %vm590, %v586, 1326507024
          %v601 = vsel %vm589, %v583, %v600
          %v602 = vsel %vm588, %v599, %v601
          %v603 = vshll.u32 %v563, 8
          %v604 = vmul.u32.u64.compose %v603, %v602
          %v605 = vextract.low.u32 %v604
          %v606 = vextract.high.u32 %v604
          %v607 = vmul.u32.u64.compose %v603, %v598
          %v608 = vextract.low.u32 %v607
          %v609 = vextract.high.u32 %v607
          %v610 = vmul.u32 %v603, %v594
          %v611 = vadd.s32 %v606, %v608
          %vm612 = vc.u32 %v606, %v608
          %v613 = vadd.s32 %v609, 1
          %v614 = vsel %vm612, %v613, %v609
          %v615 = vadd.s32 %v610, %v614
          %v616 = vadd.s32 %v615, 536870912
          %v617 = vshrl.u32 %v616, 30
          %v618 = vshll.u32 %v617, 30
          %v619 = vsub.s32 %v615, %v618
          %vm620 = vcmp.lt.s32.totalorder %v619, 0
          %v621 = vsub.s32 0, %v619
          %v622 = vsel %vm620, %v621, %v619
          %v623 = vclz %v622
          %v624 = vsub.s32 %v623, 2
          %vm625 = vcmp.gt.s32.totalorder 0, %v624
          %v626 = vsel %vm625, 0, %v624
          %v627 = vsub.s32 32, %v626
          %v628 = vshll.u32 %v619, %v626
          %v629 = vshrl.u32 %v611, %v627
          %v630 = vor.u32 %v628, %v629
          %v631 = vsub.s32 4294967266, %v626
          %v632 = vadd.s32 %v631, 127
          %v633 = vshll.u32 %v632, 23
          %v634 = vor.u32 4788187, %v633
          %v635 = vand.u32 2147483647, %v634
          %v637 = vcvt.s32.f32 %v630
          %v638 = vmul.f32 %v637, %v635
          %v639 = vxor.u32 %v638, 2147483648
          %v640 = vsel %vm557, %v639, %v638
          %v641 = vsub.s32 4, %v617
          %v642 = vsel %vm557, %v641, %v617
          %v643 = vsel %vm556, %v554, %v640
          %v644 = vsel %vm556, 0, %v642
          %v645 = vcosq.f32.pop %v643
          %v646 = vsinq.f32.pop %v643
          %vm647 = vweird.f32 %v554
          %v648 = vadd.s32 %v644, 3
          %v649 = vand.u32 %v648, 3
          %vm650 = vcmp.lt.s32.totalorder %v649, 2
          %vm651 = vcmp.eq.s32.totalorder %v649, 0
          %v652 = vxor.u32 %v646, 2147483648
          %v653 = vsel %vm651, %v645, %v652
          %vm654 = vcmp.eq.s32.totalorder %v649, 2
          %v655 = vxor.u32 %v645, 2147483648
          %v656 = vsel %vm654, %v655, %v646
          %v657 = vsel %vm650, %v653, %v656
          %v658 = vsel %vm647, nan, %v657
          %v659 = vstv %s513
          %v660 = vmul.f32 %v659, %v546
          %v661 = vstv %s517
          %v662 = vadd.f32 %v660, %v661
          %v663 = vmul.f32 %v662, %v662
          %v664 = vstv %s521
          %v665 = vsub.f32 %v664, %v663
          %v666 = vpow.pop %v665
          %v667 = vmul.f32 %v658, %v666
          %p668 = scmp.gt.f32.partialorder %s485, 0.0
          // Predicated region
          $region57: #{tpu_custom_call.1} parent=55 // pred_check
            %p669 = pneg %p668
          $region58: #{tpu_custom_call.1} parent=55 // pred_check_branch
            %671 = sbr.rel (%p669) target = $region60
          $region59: #{tpu_custom_call.1} parent=55 // pred_region
            %v672 = vstv %s493
            %v673 = vmul.f32 %v672, %v546
            %v674 = vstv %s497
            %v675 = vadd.f32 %v673, %v674
            %v676 = vand.u32 2147483647, %v675
            %vm677 = vcmp.le.f32.partialorder %v676, 0.7853982
            %vm678 = vcmp.lt.s32.totalorder %v675, 0
            %v679 = vand.u32 %v675, 2139095040
            %v680 = vshrl.u32 %v679, 23
            %v681 = vsub.s32 %v680, 127
            %v682 = vand.u32 2147483647, %v675
            %v683 = vand.u32 %v682, 8388607
            %v684 = vor.u32 %v683, 8388608
            %v685 = vsub.s32 0, %v684
            %v686 = vadd.s32 %v681, 1
            %vm687 = vcmp.gt.s32.totalorder %v686, 0
            %v688 = vsel %vm687, %v686, 0
            %v689 = vshrl.u32 %v688, 5
            %v690 = vand.u32 %v688, 31
            %v691 = vsub.s32 32, %v690
            %v692 = vshrl.u32 683565275, %v691
            %v693 = vshll.u32 683565275, %v690
            %v694 = vshrl.u32 2475754826, %v691
            %v695 = vor.u32 %v693, %v694
            %v696 = vshll.u32 2475754826, %v690
            %v697 = vshrl.u32 2131351028, %v691
            %v698 = vor.u32 %v696, %v697
            %v699 = vshll.u32 2131351028, %v690
            %v700 = vshrl.u32 2102212464, %v691
            %v701 = vor.u32 %v699, %v700
            %v702 = vshll.u32 2102212464, %v690
            %v703 = vshrl.u32 920167782, %v691
            %v704 = vor.u32 %v702, %v703
            %v705 = vshll.u32 920167782, %v690
            %v706 = vshrl.u32 1326507024, %v691
            %v707 = vor.u32 %v705, %v706
            %vm708 = vcmp.lt.s32.totalorder %v689, 1
            %vm709 = vcmp.lt.s32.totalorder %v689, 2
            %vm710 = vcmp.lt.s32.totalorder %v689, 3
            %vm711 = vcmp.lt.s32.totalorder %v689, 4
            %v712 = vsel %vm708, %v692, %v695
            %v713 = vsel %vm711, %v701, 2102212464
            %v714 = vsel %vm710, %v698, %v713
            %v715 = vsel %vm709, %v712, %v714
            %v716 = vsel %vm708, %v695, %v698
            %v717 = vsel %vm711, %v704, 920167782
            %v718 = vsel %vm710, %v701, %v717
            %v719 = vsel %vm709, %v716, %v718
            %v720 = vsel %vm708, %v698, %v701
            %v721 = vsel %vm711, %v707, 1326507024
            %v722 = vsel %vm710, %v704, %v721
            %v723 = vsel %vm709, %v720, %v722
            %v724 = vshll.u32 %v684, 8
            %v725 = vmul.u32.u64.compose %v724, %v723
            %v726 = vextract.low.u32 %v725
            %v727 = vextract.high.u32 %v725
            %v728 = vmul.u32.u64.compose %v724, %v719
            %v729 = vextract.low.u32 %v728
            %v730 = vextract.high.u32 %v728
            %v731 = vmul.u32 %v724, %v715
            %v732 = vadd.s32 %v727, %v729
            %vm733 = vc.u32 %v727, %v729
            %v734 = vadd.s32 %v730, 1
            %v735 = vsel %vm733, %v734, %v730
            %v736 = vadd.s32 %v731, %v735
            %v737 = vadd.s32 %v736, 536870912
            %v738 = vshrl.u32 %v737, 30
            %v739 = vshll.u32 %v738, 30
            %v740 = vsub.s32 %v736, %v739
            %vm741 = vcmp.lt.s32.totalorder %v740, 0
            %v742 = vsub.s32 0, %v740
            %v743 = vsel %vm741, %v742, %v740
            %v744 = vclz %v743
            %v745 = vsub.s32 %v744, 2
            %vm746 = vcmp.gt.s32.totalorder 0, %v745
            %v747 = vsel %vm746, 0, %v745
            %v748 = vsub.s32 32, %v747
            %v749 = vshll.u32 %v740, %v747
            %v750 = vshrl.u32 %v732, %v748
            %v751 = vor.u32 %v749, %v750
            %v752 = vsub.s32 4294967266, %v747
            %v753 = vadd.s32 %v752, 127
            %v754 = vshll.u32 %v753, 23
            %v755 = vor.u32 4788187, %v754
            %v756 = vand.u32 2147483647, %v755
            %v758 = vcvt.s32.f32 %v751
            %v759 = vmul.f32 %v758, %v756
            %v760 = vxor.u32 %v759, 2147483648
            %v761 = vsel %vm678, %v760, %v759
            %v762 = vsub.s32 4, %v738
            %v763 = vsel %vm678, %v762, %v738
            %v764 = vsel %vm677, %v675, %v761
            %v765 = vsel %vm677, 0, %v763
            %v766 = vcosq.f32.pop %v764
            %v767 = vsinq.f32.pop %v764
            %vm768 = vweird.f32 %v675
            %v769 = vadd.s32 %v765, 3
            %v770 = vand.u32 %v769, 3
            %vm771 = vcmp.lt.s32.totalorder %v770, 2
            %vm772 = vcmp.eq.s32.totalorder %v770, 0
            %v773 = vxor.u32 %v767, 2147483648
            %v774 = vsel %vm772, %v766, %v773
            %vm775 = vcmp.eq.s32.totalorder %v770, 2
            %v776 = vxor.u32 %v766, 2147483648
            %v777 = vsel %vm775, %v776, %v767
            %v778 = vsel %vm771, %v774, %v777
            %v779 = vsel %vm768, nan, %v778
            %v780 = vmul.f32 %v667, %v779
            %s781 = scalar_lea.vmem %s164, 8 [#allocation7]
            %782 = vst [vmem:[%s781] sm:$0xff] %v780
          $region60: #{tpu_custom_call.1} parent=55 // pred_fallthru
            _
          %p783 = scmp.le.f32.partialorder %s485, 0.0
          // Predicated region
          $region61: #{tpu_custom_call.1} parent=55 // pred_check
            %p784 = pneg %p783
          $region62: #{tpu_custom_call.1} parent=55 // pred_check_branch
            %786 = sbr.rel (%p784) target = $region64
          $region63: #{tpu_custom_call.1} parent=55 // pred_region
            %s787 = scalar_lea.vmem %s164, 8 [#allocation7]
            %788 = vst [vmem:[%s787] sm:$0xff] %v667
          $region64: #{tpu_custom_call.1} parent=55 // pred_fallthru
            _
        $region56: #{tpu_custom_call.1} parent=27 // pred_fallthru
          _
        %p789 = pneg %p538
        // Predicated region
        $region65: #{tpu_custom_call.1} parent=27 // pred_check
          _
        $region66: #{tpu_custom_call.1} parent=27 // pred_check_branch
          %791 = sbr.rel (%p538) target = $region68
        $region67: #{tpu_custom_call.1} parent=27 // pred_region
          %s792 = scalar_lea.vmem %s164, 8 [#allocation7]
          %793 = vst [vmem:[%s792] sm:$0xff] 0.0
        $region68: #{tpu_custom_call.1} parent=27 // pred_fallthru
          _
        %s794 = sand.u32 %s82, 1
        %s795 = scalar_lea.sflag [#allocation3], %s794
        %s796 = sand.u32 %s82, 1
        %s797 = smul.addr %s796, 16
        %s798 = scalar_lea.vmem [#allocation7], %s797
        // Predicated region
        $region69: #{tpu_custom_call.1} parent=27 // pred_check
          %p799 = pneg %p92
        $region70: #{tpu_custom_call.1} parent=27 // pred_check_branch
          %801 = sbr.rel (%p799) target = $region72
        $region71: #{tpu_custom_call.1} parent=27 // pred_region
          %s802 = smul.u32 2, %s22
          %s804 = ssub.s32 256, 256
          %805 = vsyncadd %s795, %s804
          %s806 = smul.addr %s802, 2
          %s807 = sadd.s32 %s23, %s806
          %s808 = smul.addr %s807, 128
          %s809 = scalar_lea.hbm %s2, %s808
          %s810 = sshll.u32 %s798, 4
          %s811 = int_to_ptr.vmem [resolvable:$true] %s810
          %816 = dma.vmem_to_hbm [thread:$0]  %s811, 256, %s809, %s795, 128, 256, 8
        $region72: #{tpu_custom_call.1} parent=27 // pred_fallthru
          _
      $region28: #{tpu_custom_call.1} parent=5 // pred_fallthru
        _
      %p817 = scmp.le.s32.totalorder 2, %s13
      // Predicated region
      $region73: #{tpu_custom_call.1} parent=5 // pred_check
        %p818 = pneg %p817
      $region74: #{tpu_custom_call.1} parent=5 // pred_check_branch
        %820 = sbr.rel (%p818) target = $region76
      $region75: #{tpu_custom_call.1} parent=5 // pred_region
        %s821 = ssub.s32 %s13, 2
        // Predicated region
        $region77: #{tpu_custom_call.1} parent=75 // pred_check
          %p822 = pneg %p98
        $region78: #{tpu_custom_call.1} parent=75 // pred_check_branch
          %824 = sbr.rel (%p822) target = $region80
        $region79: #{tpu_custom_call.1} parent=75 // pred_region
          %s825 = sand.u32 %s83, 1
          %s826 = scalar_lea.sflag [#allocation3], %s825
          %s827 = sand.u32 %s83, 1
          %s828 = smul.addr %s827, 16
          %s829 = scalar_lea.vmem [#allocation7], %s828
          %830 = dma.done %s826, 256
        $region80: #{tpu_custom_call.1} parent=75 // pred_fallthru
          _
      $region76: #{tpu_custom_call.1} parent=5 // pred_fallthru
        _
    $region6: #{tpu_custom_call.1} parent=1 // loop_footer
      %s17 = sadd.s32 1, %s13
    $region7: #{tpu_custom_call.1} parent=1 // loop_footer_branch
      %12 = sbr.rel target = $region3
    $region8: #{tpu_custom_call.1} parent=1 // loop_exit
      _
    %831 = vsyncpa [#allocation3], 1
    %s832 = scalar_lea.sflag [#allocation3], 1
    %833 = vsyncpa %s832, 1
    %834 = vsyncpa [#allocation4], 1
    %s835 = scalar_lea.sflag [#allocation4], 1
    %836 = vsyncpa %s835, 1
    %837 = vsyncpa [#allocation6], 1

</llo_original>
